<compile_context>
chip_gen: v5e
topology: v5e:2x2
jax: 0.10.0
libtpu: 0.0.40
codegen_flags: <defaults>
</compile_context>

<pallas_src>
import functools
import math

import jax
import jax.numpy as jnp
from jax.experimental import pallas as pl
from jax.experimental.pallas import tpu as pltpu

_EPS = 1e-6

_NORM_SIGMOID = 0
_NORM_SOFTMAX = 1
_NORM_NONE = 2

_TARGET_TILE_BYTES = 2 * 1024 * 1024      # per input tile per buffer in VMEM
_VMEM_LIMIT_BYTES = 32 * 1024 * 1024      # safe on v5e / v6e / v7x


def _cdiv(a, b):
    return -(-a // b)


def _dice_partial_kernel(norm_mode, m_total, tm,
                         x_ref, t_ref, out_ref,
                         acc_i_ref, acc_pp_ref, acc_tt_ref):
    """Accumulates per-row partial sums of (p*t, p*p, t*t) over lane tiles.

    x_ref / t_ref : (B, R, TM) VMEM tiles
        sigmoid/none : B = 1, R = N*C  (row r = n*C + c)
        softmax      : B = N, R = C    (softmax over axis 1)
    out_ref       : (1, R, 3) per-super-block partials (intersect, sum p^2, sum t^2)
    acc_*_ref     : (R, TM) f32 lane-wise accumulators (VMEM scratch)
    """
    k = pl.program_id(1)
    nk = pl.num_programs(1)

    @pl.when(k == 0)
    def _init():
        acc_i_ref[...] = jnp.zeros_like(acc_i_ref)
        acc_pp_ref[...] = jnp.zeros_like(acc_pp_ref)
        acc_tt_ref[...] = jnp.zeros_like(acc_tt_ref)

    x = x_ref[...].astype(jnp.float32)
    t = t_ref[...].astype(jnp.float32)

    if norm_mode == _NORM_SIGMOID:
        p = jax.nn.sigmoid(x)
    elif norm_mode == _NORM_SOFTMAX:
        m = jnp.max(x, axis=1, keepdims=True)
        e = jnp.exp(x - m)
        p = e * pl.reciprocal(jnp.sum(e, axis=1, keepdims=True), approx=True)
    else:
        p = x

    # Mask lanes beyond the flattened spatial extent (partial last tile and the
    # clamped padded-tail tiles of the (G, K) grid).
    block_idx = pl.program_id(0) * nk + k
    lane = jax.lax.broadcasted_iota(jnp.int32, (1, tm), 1)
    valid = (block_idx * tm + lane) < m_total           # (1, TM) -> broadcast

    pt = jnp.where(valid, p * t, 0.0)
    pp = jnp.where(valid, p * p, 0.0)
    tt = jnp.where(valid, t * t, 0.0)

    # Lane-wise accumulation (pure VPU adds); cross-lane reduce only at finalize.
    acc_i_ref[...] += jnp.sum(pt, axis=0)
    acc_pp_ref[...] += jnp.sum(pp, axis=0)
    acc_tt_ref[...] += jnp.sum(tt, axis=0)

    @pl.when(k == nk - 1)
    def _finalize():
        out_ref[0, :, 0:1] = jnp.sum(acc_i_ref[...], axis=-1, keepdims=True)
        out_ref[0, :, 1:2] = jnp.sum(acc_pp_ref[...], axis=-1, keepdims=True)
        out_ref[0, :, 2:3] = jnp.sum(acc_tt_ref[...], axis=-1, keepdims=True)


def dice_loss(x, target, weight=None, normalization="sigmoid",
              tile_bytes=_TARGET_TILE_BYTES):
    """JAX/Pallas equivalent of _AbstractDiceLoss.forward (standard Dice)."""
    assert normalization in ("sigmoid", "softmax", "none")
    norm_mode = {"sigmoid": _NORM_SIGMOID,
                 "softmax": _NORM_SOFTMAX,
                 "none": _NORM_NONE}[normalization]

    n, c = int(x.shape[0]), int(x.shape[1])
    m = int(math.prod(x.shape[2:]))

    if norm_mode == _NORM_SOFTMAX:
        b, r = n, c                       # softmax needs full channel axis per block
    else:
        b, r = 1, n * c                   # sublane-dense layout for the default path

    # Free (contiguous) reshapes of NCHW / NCDHW -- no transpose, no extra HBM pass.
    x3 = x.reshape(b, r, m)
    t3 = target.reshape(b, r, m)

    # ---- tile sizing: ~tile_bytes per input tile (double buffered by Pallas) ----
    # TODO(synk): for extremely large N*C the full-row block would need a row-axis
    # grid as well; realistic segmentation shapes (N*C up to a few hundred) are fine.
    rows_pad = b * (_cdiv(r, 8) * 8)                       # f32 sublane padding
    tm = max(128, (tile_bytes // (rows_pad * 4)) // 128 * 128)
    if tm >= m:
        tm, nb = m, 1
    else:
        nb = _cdiv(m, tm)

    # grid: (parallel super-blocks for megacore/v7x) x (sequential accumulation)
    g_par = min(2, nb)
    k_seq = _cdiv(nb, g_par)

    def in_index_map(g, k):
        bi = g * k_seq + k
        return (0, 0, jnp.minimum(bi, nb - 1))   # clamp padded tail (masked in kernel)

    kernel = functools.partial(_dice_partial_kernel, norm_mode, m, tm)

    total_bytes = (x3.size * x3.dtype.itemsize + t3.size * t3.dtype.itemsize
                   + g_par * r * 3 * 4)
    cost = pl.CostEstimate(
        flops=8 * x3.size,
        transcendentals=(x3.size if norm_mode != _NORM_NONE else 0),
        bytes_accessed=total_bytes)

    partials = pl.pallas_call(
        kernel,
        out_shape=jax.ShapeDtypeStruct((g_par, r, 3), jnp.float32),
        grid_spec=pltpu.PrefetchScalarGridSpec(
            num_scalar_prefetch=0,
            grid=(g_par, k_seq),
            in_specs=[
                pl.BlockSpec((b, r, tm), in_index_map),
                pl.BlockSpec((b, r, tm), in_index_map),
            ],
            out_specs=pl.BlockSpec((1, r, 3), lambda g, k: (g, 0, 0)),
            scratch_shapes=[pltpu.VMEM((r, tm), jnp.float32)] * 3,
        ),
        compiler_params=pltpu.CompilerParams(
            dimension_semantics=("parallel", "arbitrary"),
            vmem_limit_bytes=_VMEM_LIMIT_BYTES),
        cost_estimate=cost,
    )(x3, t3)

    # Tiny epilogue in plain JAX (a few dozen scalars): fold super-blocks and batch,
    # apply the optional per-channel weight, clamp, and average.
    sums = jnp.sum(partials, axis=0)                       # (R, 3)
    per_ch = jnp.sum(sums.reshape(-1, c, 3), axis=0)       # (C, 3)
    intersect = per_ch[:, 0]
    denom = per_ch[:, 1] + per_ch[:, 2]
    if weight is not None:
        intersect = jnp.asarray(weight, jnp.float32) * intersect
    dice = 2.0 * intersect / jnp.maximum(denom, _EPS)
    return 1.0 - jnp.mean(dice)


def dice_loss_ref(x, target, weight=None, normalization="sigmoid"):
    """Pure-JAX reference for verification."""
    xf = x.astype(jnp.float32)
    if normalization == "sigmoid":
        p = jax.nn.sigmoid(xf)
    elif normalization == "softmax":
        p = jax.nn.softmax(xf, axis=1)
    else:
        p = xf
    t = target.astype(jnp.float32)
    c = x.shape[1]
    pf = jnp.moveaxis(p, 1, 0).reshape(c, -1)
    tf = jnp.moveaxis(t, 1, 0).reshape(c, -1)
    intersect = jnp.sum(pf * tf, axis=-1)
    denom = jnp.sum(pf * pf, axis=-1) + jnp.sum(tf * tf, axis=-1)
    if weight is not None:
        intersect = jnp.asarray(weight, jnp.float32) * intersect
    dice = 2.0 * intersect / jnp.maximum(denom, _EPS)
    return 1.0 - jnp.mean(dice)


if __name__ == "__main__":
    key = jax.random.PRNGKey(0)
    k1, k2, k3, k4 = jax.random.split(key, 4)

    loss_fn = jax.jit(dice_loss, static_argnames=("normalization", "tile_bytes"))

    # ---- main config: N=2, C=4, H=W=16, default sigmoid normalization ----
    N, C, H, W = 2, 4, 16, 16
    x = jax.random.normal(k1, (N, C, H, W), dtype=jnp.float32)           # logits
    tgt = (jax.random.uniform(k2, (N, C, H, W)) > 0.5).astype(jnp.float32)

    loss = jax.block_until_ready(loss_fn(x, tgt, normalization="sigmoid"))
    ref = dice_loss_ref(x, tgt, normalization="sigmoid")
    assert jnp.allclose(loss, ref, atol=1e-5, rtol=1e-5), (loss, ref)

    # weighted sigmoid
    w = jnp.array([0.2, 0.4, 0.6, 0.8], jnp.float32)
    loss_w = jax.block_until_ready(loss_fn(x, tgt, w, normalization="sigmoid"))
    ref_w = dice_loss_ref(x, tgt, w, normalization="sigmoid")
    assert jnp.allclose(loss_w, ref_w, atol=1e-5, rtol=1e-5), (loss_w, ref_w)

    # softmax path (approx reciprocal in-kernel -> slightly looser tolerance)
    loss_sm = jax.block_until_ready(loss_fn(x, tgt, normalization="softmax"))
    ref_sm = dice_loss_ref(x, tgt, normalization="softmax")
    assert jnp.allclose(loss_sm, ref_sm, atol=2e-3, rtol=2e-3), (loss_sm, ref_sm)

    # 'none' normalization path
    loss_id = jax.block_until_ready(loss_fn(x, tgt, normalization="none"))
    ref_id = dice_loss_ref(x, tgt, normalization="none")
    assert jnp.allclose(loss_id, ref_id, atol=1e-5, rtol=1e-5), (loss_id, ref_id)

    # ---- exercise the tiled / masked / multi-super-block path (tiny tiles) ----
    H2, W2 = 17, 17                                    # M = 289, not a tile multiple
    x2 = jax.random.normal(k3, (N, C, H2, W2), dtype=jnp.float32)
    t2 = (jax.random.uniform(k4, (N, C, H2, W2)) > 0.5).astype(jnp.float32)

    loss_t = jax.block_until_ready(
        loss_fn(x2, t2, normalization="sigmoid", tile_bytes=4096))
    ref_t = dice_loss_ref(x2, t2, normalization="sigmoid")
    assert jnp.allclose(loss_t, ref_t, atol=1e-5, rtol=1e-5), (loss_t, ref_t)

    loss_ts = jax.block_until_ready(
        loss_fn(x2, t2, normalization="softmax", tile_bytes=4096))
    ref_ts = dice_loss_ref(x2, t2, normalization="softmax")
    assert jnp.allclose(loss_ts, ref_ts, atol=2e-3, rtol=2e-3), (loss_ts, ref_ts)

    print("KERNEL_OK")
</pallas_src>

<mosaic_0001>
module attributes {stable_mosaic.version = 11 : i64} {
  func.func @_dice_partial_kernel(%arg0: i32, %arg1: i32, %arg2: memref<1x8x256xf32, #tpu.memory_space<vmem>>, %arg3: memref<1x8x256xf32, #tpu.memory_space<vmem>>, %arg4: memref<1x8x3xf32, #tpu.memory_space<vmem>>, %arg5: memref<8x256xf32, #tpu.memory_space<vmem>>, %arg6: memref<8x256xf32, #tpu.memory_space<vmem>>, %arg7: memref<8x256xf32, #tpu.memory_space<vmem>>) attributes {dimension_semantics = [#tpu.dimension_semantics<parallel>, #tpu.dimension_semantics<arbitrary>], iteration_bounds = array<i64: 1, 1>, scalar_prefetch = 0 : i64, scratch_operands = 3 : i64, tpu.core_type = #tpu.core_type<tc>, window_params = [{transform_indices = @transform_0, window_bounds = array<i64: 1, 8, 256>}, {transform_indices = @transform_1, window_bounds = array<i64: 1, 8, 256>}, {transform_indices = @transform_2, window_bounds = array<i64: 1, 8, 3>}]} {
    %c0_i32 = arith.constant 0 : i32
    %0 = arith.cmpi eq, %arg1, %c0_i32 : i32
    %1 = arith.extui %0 : i1 to i32
    %c0_i32_0 = arith.constant 0 : i32
    %2 = arith.cmpi ne, %1, %c0_i32_0 : i32
    scf.if %2 {
      %cst_27 = arith.constant 0.000000e+00 : f32
      %48 = vector.broadcast %cst_27 : f32 to vector<8x256xf32>
      %c0_28 = arith.constant 0 : index
      %c0_29 = arith.constant 0 : index
      %49 = vector.load %arg5[%c0_28, %c0_29] : memref<8x256xf32, #tpu.memory_space<vmem>>, vector<8x256xf32>
      tpu.vector_store %arg5[%c0_28, %c0_29], %48 {strides = array<i32>} : memref<8x256xf32, #tpu.memory_space<vmem>>, vector<8x256xf32>,
      %cst_30 = arith.constant 0.000000e+00 : f32
      %50 = vector.broadcast %cst_30 : f32 to vector<8x256xf32>
      %c0_31 = arith.constant 0 : index
      %c0_32 = arith.constant 0 : index
      %51 = vector.load %arg6[%c0_31, %c0_32] : memref<8x256xf32, #tpu.memory_space<vmem>>, vector<8x256xf32>
      tpu.vector_store %arg6[%c0_31, %c0_32], %50 {strides = array<i32>} : memref<8x256xf32, #tpu.memory_space<vmem>>, vector<8x256xf32>,
      %cst_33 = arith.constant 0.000000e+00 : f32
      %52 = vector.broadcast %cst_33 : f32 to vector<8x256xf32>
      %c0_34 = arith.constant 0 : index
      %c0_35 = arith.constant 0 : index
      %53 = vector.load %arg7[%c0_34, %c0_35] : memref<8x256xf32, #tpu.memory_space<vmem>>, vector<8x256xf32>
      tpu.vector_store %arg7[%c0_34, %c0_35], %52 {strides = array<i32>} : memref<8x256xf32, #tpu.memory_space<vmem>>, vector<8x256xf32>,
    } else {
    }
    %c0 = arith.constant 0 : index
    %c0_1 = arith.constant 0 : index
    %c0_2 = arith.constant 0 : index
    %3 = vector.load %arg2[%c0, %c0_1, %c0_2] : memref<1x8x256xf32, #tpu.memory_space<vmem>>, vector<1x8x256xf32>
    %c0_3 = arith.constant 0 : index
    %c0_4 = arith.constant 0 : index
    %c0_5 = arith.constant 0 : index
    %4 = vector.load %arg3[%c0_3, %c0_4, %c0_5] : memref<1x8x256xf32, #tpu.memory_space<vmem>>, vector<1x8x256xf32>
    %5 = arith.negf %3 : vector<1x8x256xf32>
    %6 = math.exp %5 : vector<1x8x256xf32>
    %cst = arith.constant 1.000000e+00 : f32
    %7 = vector.broadcast %cst : f32 to vector<1x8x256xf32>
    %8 = arith.addf %7, %6 : vector<1x8x256xf32>
    %9 = arith.divf %7, %8 : vector<1x8x256xf32>
    %c1_i32 = arith.constant 1 : i32
    %10 = arith.muli %arg0, %c1_i32 : i32
    %11 = arith.addi %10, %arg1 : i32
    %12 = tpu.iota {dimensions = array<i32: 1>} : vector<1x256xi32>
    %c256_i32 = arith.constant 256 : i32
    %13 = arith.muli %11, %c256_i32 : i32
    %14 = vector.broadcast %13 : i32 to vector<1x256xi32>
    %15 = arith.addi %14, %12 : vector<1x256xi32>
    %c256_i32_6 = arith.constant 256 : i32
    %16 = vector.broadcast %c256_i32_6 : i32 to vector<1x256xi32>
    %17 = arith.cmpi slt, %15, %16 : vector<1x256xi32>
    %18 = arith.mulf %9, %4 : vector<1x8x256xf32>
    %cst_7 = arith.constant 0.000000e+00 : f32
    %19 = vector.shape_cast %17 : vector<1x256xi1> to vector<1x1x256xi1>
    %20 = vector.broadcast %19 : vector<1x1x256xi1> to vector<1x8x256xi1>
    %21 = vector.broadcast %cst_7 : f32 to vector<1x8x256xf32>
    %22 = arith.select %20, %18, %21 : vector<1x8x256xi1>, vector<1x8x256xf32>
    %23 = arith.mulf %9, %9 : vector<1x8x256xf32>
    %cst_8 = arith.constant 0.000000e+00 : f32
    %24 = vector.shape_cast %17 : vector<1x256xi1> to vector<1x1x256xi1>
    %25 = vector.broadcast %24 : vector<1x1x256xi1> to vector<1x8x256xi1>
    %26 = vector.broadcast %cst_8 : f32 to vector<1x8x256xf32>
    %27 = arith.select %25, %23, %26 : vector<1x8x256xi1>, vector<1x8x256xf32>
    %28 = arith.mulf %4, %4 : vector<1x8x256xf32>
    %cst_9 = arith.constant 0.000000e+00 : f32
    %29 = vector.shape_cast %17 : vector<1x256xi1> to vector<1x1x256xi1>
    %30 = vector.broadcast %29 : vector<1x1x256xi1> to vector<1x8x256xi1>
    %31 = vector.broadcast %cst_9 : f32 to vector<1x8x256xf32>
    %32 = arith.select %30, %28, %31 : vector<1x8x256xi1>, vector<1x8x256xf32>
    %c0_10 = arith.constant 0 : index
    %c0_11 = arith.constant 0 : index
    %33 = vector.load %arg5[%c0_10, %c0_11] : memref<8x256xf32, #tpu.memory_space<vmem>>, vector<8x256xf32>
    %cst_12 = arith.constant dense<0.000000e+00> : vector<8x256xf32>
    %34 = vector.multi_reduction <add>, %22, %cst_12 [0] : vector<1x8x256xf32> to vector<8x256xf32>
    %35 = arith.addf %33, %34 : vector<8x256xf32>
    %c0_13 = arith.constant 0 : index
    %c0_14 = arith.constant 0 : index
    %36 = vector.load %arg5[%c0_13, %c0_14] : memref<8x256xf32, #tpu.memory_space<vmem>>, vector<8x256xf32>
    tpu.vector_store %arg5[%c0_13, %c0_14], %35 {strides = array<i32>} : memref<8x256xf32, #tpu.memory_space<vmem>>, vector<8x256xf32>,
    %c0_15 = arith.constant 0 : index
    %c0_16 = arith.constant 0 : index
    %37 = vector.load %arg6[%c0_15, %c0_16] : memref<8x256xf32, #tpu.memory_space<vmem>>, vector<8x256xf32>
    %cst_17 = arith.constant dense<0.000000e+00> : vector<8x256xf32>
    %38 = vector.multi_reduction <add>, %27, %cst_17 [0] : vector<1x8x256xf32> to vector<8x256xf32>
    %39 = arith.addf %37, %38 : vector<8x256xf32>
    %c0_18 = arith.constant 0 : index
    %c0_19 = arith.constant 0 : index
    %40 = vector.load %arg6[%c0_18, %c0_19] : memref<8x256xf32, #tpu.memory_space<vmem>>, vector<8x256xf32>
    tpu.vector_store %arg6[%c0_18, %c0_19], %39 {strides = array<i32>} : memref<8x256xf32, #tpu.memory_space<vmem>>, vector<8x256xf32>,
    %c0_20 = arith.constant 0 : index
    %c0_21 = arith.constant 0 : index
    %41 = vector.load %arg7[%c0_20, %c0_21] : memref<8x256xf32, #tpu.memory_space<vmem>>, vector<8x256xf32>
    %cst_22 = arith.constant dense<0.000000e+00> : vector<8x256xf32>
    %42 = vector.multi_reduction <add>, %32, %cst_22 [0] : vector<1x8x256xf32> to vector<8x256xf32>
    %43 = arith.addf %41, %42 : vector<8x256xf32>
    %c0_23 = arith.constant 0 : index
    %c0_24 = arith.constant 0 : index
    %44 = vector.load %arg7[%c0_23, %c0_24] : memref<8x256xf32, #tpu.memory_space<vmem>>, vector<8x256xf32>
    tpu.vector_store %arg7[%c0_23, %c0_24], %43 {strides = array<i32>} : memref<8x256xf32, #tpu.memory_space<vmem>>, vector<8x256xf32>,
    %c0_i32_25 = arith.constant 0 : i32
    %45 = arith.cmpi eq, %arg1, %c0_i32_25 : i32
    %46 = arith.extui %45 : i1 to i32
    %c0_i32_26 = arith.constant 0 : i32
    %47 = arith.cmpi ne, %46, %c0_i32_26 : i32
    scf.if %47 {
      %c0_27 = arith.constant 0 : index
      %c0_28 = arith.constant 0 : index
      %48 = vector.load %arg5[%c0_27, %c0_28] : memref<8x256xf32, #tpu.memory_space<vmem>>, vector<8x256xf32>
      %cst_29 = arith.constant dense<0.000000e+00> : vector<8xf32>
      %49 = vector.multi_reduction <add>, %48, %cst_29 [1] : vector<8x256xf32> to vector<8xf32>
      %50 = vector.shape_cast %49 : vector<8xf32> to vector<8x1xf32>
      %c0_30 = arith.constant 0 : index
      %c0_31 = arith.constant 0 : index
      %c0_32 = arith.constant 0 : index
      %51 = vector.load %arg4[%c0_30, %c0_31, %c0_32] : memref<1x8x3xf32, #tpu.memory_space<vmem>>, vector<1x8x1xf32>
      %52 = vector.shape_cast %51 : vector<1x8x1xf32> to vector<8x1xf32>
      %53 = vector.shape_cast %50 : vector<8x1xf32> to vector<1x8x1xf32>
      tpu.vector_store %arg4[%c0_30, %c0_31, %c0_32], %53 {strides = array<i32>} : memref<1x8x3xf32, #tpu.memory_space<vmem>>, vector<1x8x1xf32>,
      %c0_33 = arith.constant 0 : index
      %c0_34 = arith.constant 0 : index
      %54 = vector.load %arg6[%c0_33, %c0_34] : memref<8x256xf32, #tpu.memory_space<vmem>>, vector<8x256xf32>
      %cst_35 = arith.constant dense<0.000000e+00> : vector<8xf32>
      %55 = vector.multi_reduction <add>, %54, %cst_35 [1] : vector<8x256xf32> to vector<8xf32>
      %56 = vector.shape_cast %55 : vector<8xf32> to vector<8x1xf32>
      %c0_36 = arith.constant 0 : index
      %c0_37 = arith.constant 0 : index
      %c1 = arith.constant 1 : index
      %57 = vector.load %arg4[%c0_36, %c0_37, %c1] : memref<1x8x3xf32, #tpu.memory_space<vmem>>, vector<1x8x1xf32>
      %58 = vector.shape_cast %57 : vector<1x8x1xf32> to vector<8x1xf32>
      %59 = vector.shape_cast %56 : vector<8x1xf32> to vector<1x8x1xf32>
      tpu.vector_store %arg4[%c0_36, %c0_37, %c1], %59 {strides = array<i32>} : memref<1x8x3xf32, #tpu.memory_space<vmem>>, vector<1x8x1xf32>,
      %c0_38 = arith.constant 0 : index
      %c0_39 = arith.constant 0 : index
      %60 = vector.load %arg7[%c0_38, %c0_39] : memref<8x256xf32, #tpu.memory_space<vmem>>, vector<8x256xf32>
      %cst_40 = arith.constant dense<0.000000e+00> : vector<8xf32>
      %61 = vector.multi_reduction <add>, %60, %cst_40 [1] : vector<8x256xf32> to vector<8xf32>
      %62 = vector.shape_cast %61 : vector<8xf32> to vector<8x1xf32>
      %c0_41 = arith.constant 0 : index
      %c0_42 = arith.constant 0 : index
      %c2 = arith.constant 2 : index
      %63 = vector.load %arg4[%c0_41, %c0_42, %c2] : memref<1x8x3xf32, #tpu.memory_space<vmem>>, vector<1x8x1xf32>
      %64 = vector.shape_cast %63 : vector<1x8x1xf32> to vector<8x1xf32>
      %65 = vector.shape_cast %62 : vector<8x1xf32> to vector<1x8x1xf32>
      tpu.vector_store %arg4[%c0_41, %c0_42, %c2], %65 {strides = array<i32>} : memref<1x8x3xf32, #tpu.memory_space<vmem>>, vector<1x8x1xf32>,
    } else {
    }
    return
  }
  func.func @transform_0(%arg0: i32, %arg1: i32) -> (i32, i32, i32) {
    %c1_i32 = arith.constant 1 : i32
    %0 = arith.muli %arg0, %c1_i32 : i32
    %1 = arith.addi %0, %arg1 : i32
    %c0_i32 = arith.constant 0 : i32
    %2 = arith.minsi %1, %c0_i32 : i32
    %c0_i32_0 = arith.constant 0 : i32
    %c0_i32_1 = arith.constant 0 : i32
    %c0_i32_2 = arith.constant 0 : i32
    return %c0_i32_0, %c0_i32_1, %2 : i32, i32, i32
  }
  func.func @transform_1(%arg0: i32, %arg1: i32) -> (i32, i32, i32) {
    %c1_i32 = arith.constant 1 : i32
    %0 = arith.muli %arg0, %c1_i32 : i32
    %1 = arith.addi %0, %arg1 : i32
    %c0_i32 = arith.constant 0 : i32
    %2 = arith.minsi %1, %c0_i32 : i32
    %c0_i32_0 = arith.constant 0 : i32
    %c0_i32_1 = arith.constant 0 : i32
    %c0_i32_2 = arith.constant 0 : i32
    return %c0_i32_0, %c0_i32_1, %2 : i32, i32, i32
  }
  func.func @transform_2(%arg0: i32, %arg1: i32) -> (i32, i32, i32) {
    %c0_i32 = arith.constant 0 : i32
    %c0_i32_0 = arith.constant 0 : i32
    %c0_i32_1 = arith.constant 0 : i32
    return %arg0, %c0_i32, %c0_i32_0 : i32, i32, i32
  }
}

</mosaic_0001>

<llo_original>
// kernel: dice_loss.1
$region0: #{dice_loss.1}
  #allocation0 [shape = 'u32[]', space=smem, size = 0x4, offset = 0x4, fixed_abs, tag = 'smem constant byte address 0x4 - core index']
  #allocation1 [shape = 'u32[72,128]{1,0:T(1,128)}', space=vmem, size = 0x9000, scoped, tag = 'internal scratch']
  #allocation2 [shape = 'f32[8,256]{1,0:T(8,128)}', space=vmem, size = 0x2000, scoped, tag = 'scratch operand']
  #allocation3 [shape = 'f32[8,256]{1,0:T(8,128)}', space=vmem, size = 0x2000, scoped, tag = 'scratch operand']
  #allocation4 [shape = 'f32[8,256]{1,0:T(8,128)}', space=vmem, size = 0x2000, scoped, tag = 'scratch operand']
  %s0 = inlined_call_operand.vmem [shape: f32[1,8,256], index: 0, kind: input, shape index: {}]
  %s1 = inlined_call_operand.vmem [shape: f32[1,8,256], index: 1, kind: input, shape index: {}]
  %s2 = inlined_call_operand.vmem [shape: f32[1,8,3], index: 2, kind: output, shape index: {}]
  %s3 = sld [smem:[#allocation0]]
  $region26: #{dice_loss.1} parent=0
    _
  %s5 = ssub.s32 1, %s3
  %s6 = scalar_select 0, %s5, %s3
  // Predicated region
  $region2: #{dice_loss.1} parent=0 // pred_check
    _
  $region3: #{dice_loss.1} parent=0 // pred_check_branch
    %8 = sbr.rel (0) target = $region5
  $region4: #{dice_loss.1} parent=0 // pred_region
    %s9 = sadd.s32 0, 0
    %p10 = scmp.lt.s32.totalorder %s9, 0
    %s11 = scalar_select %p10, %s9, 0
    %s12 = smul.u32 2, %s11
    %p13 = scmp.lt.s32.totalorder %s12, 1
    %s14 = scalar_select %p13, %s12, 1
    %s15 = smul.addr %s14, 8
    %s16 = scalar_lea.vmem %s0, %s15
    %s17 = sadd.s32 0, 0
    %p18 = scmp.lt.s32.totalorder %s17, 0
    %s19 = scalar_select %p18, %s17, 0
    %s20 = smul.u32 2, %s19
  $region5: #{dice_loss.1} parent=0 // pred_fallthru
    _
  // Predicated region
  $region6: #{dice_loss.1} parent=0 // pred_check
    _
  $region7: #{dice_loss.1} parent=0 // pred_check_branch
    %22 = sbr.rel (0) target = $region9
  $region8: #{dice_loss.1} parent=0 // pred_region
    %s23 = sadd.s32 0, 0
    %p24 = scmp.lt.s32.totalorder %s23, 0
    %s25 = scalar_select %p24, %s23, 0
    %s26 = smul.u32 2, %s25
    %p27 = scmp.lt.s32.totalorder %s26, 1
    %s28 = scalar_select %p27, %s26, 1
    %s29 = smul.addr %s28, 8
    %s30 = scalar_lea.vmem %s1, %s29
    %s31 = sadd.s32 0, 0
    %p32 = scmp.lt.s32.totalorder %s31, 0
    %s33 = scalar_select %p32, %s31, 0
    %s34 = smul.u32 2, %s33
  $region9: #{dice_loss.1} parent=0 // pred_fallthru
    _
  %s35 = sadd.s32 0, 0
  %p36 = scmp.lt.s32.totalorder %s35, 0
  %s37 = scalar_select %p36, %s35, 0
  %s38 = smul.u32 2, %s37
  %p39 = scmp.lt.s32.totalorder %s38, 1
  %s40 = scalar_select %p39, %s38, 1
  %s41 = smul.addr %s40, 8
  %s42 = scalar_lea.vmem %s0, %s41
  %s43 = sadd.s32 0, 0
  %p44 = scmp.lt.s32.totalorder %s43, 0
  %s45 = scalar_select %p44, %s43, 0
  %s46 = smul.u32 2, %s45
  %p47 = scmp.lt.s32.totalorder %s46, 1
  %s48 = scalar_select %p47, %s46, 1
  %s49 = smul.addr %s48, 8
  %s50 = scalar_lea.vmem %s1, %s49
  %s51 = sadd.s32 0, 0
  %p52 = scmp.lt.s32.totalorder %s51, 0
  %s53 = scalar_select %p52, %s51, 0
  %s54 = smul.u32 2, %s53
  %p55 = scmp.lt.s32.totalorder %s54, 1
  %s56 = scalar_select %p55, %s54, 1
  %s57 = smul.addr %s56, 8
  %s58 = scalar_lea.vmem %s0, %s57
  %s59 = sadd.s32 0, 0
  %p60 = scmp.lt.s32.totalorder %s59, 0
  %s61 = scalar_select %p60, %s59, 0
  %s62 = smul.u32 2, %s61
  %s63 = sadd.s32 0, 0
  %p64 = scmp.lt.s32.totalorder %s63, 0
  %s65 = scalar_select %p64, %s63, 0
  %s66 = smul.u32 2, %s65
  %p67 = scmp.lt.s32.totalorder %s66, 1
  %s68 = scalar_select %p67, %s66, 1
  %s69 = smul.addr %s68, 8
  %s70 = scalar_lea.vmem %s1, %s69
  %s71 = sadd.s32 0, 0
  %p72 = scmp.lt.s32.totalorder %s71, 0
  %s73 = scalar_select %p72, %s71, 0
  %s74 = smul.u32 2, %s73
  %p75 = scmp.eq.s32.totalorder 0, 0
  // Predicated region
  $region10: #{dice_loss.1} parent=0 // pred_check
    %p76 = pneg %p75
  $region11: #{dice_loss.1} parent=0 // pred_check_branch
    %78 = sbr.rel (%p76) target = $region13
  $region12: #{dice_loss.1} parent=0 // pred_region
    %79 = vst [vmem:[#allocation2] sm:$0xff] 0.0
    %80 = vst [vmem:[#allocation2 + $0x8] sm:$0xff] 0.0
    %81 = vst [vmem:[#allocation3] sm:$0xff] 0.0
    %82 = vst [vmem:[#allocation3 + $0x8] sm:$0xff] 0.0
    %83 = vst [vmem:[#allocation4] sm:$0xff] 0.0
    %84 = vst [vmem:[#allocation4 + $0x8] sm:$0xff] 0.0
  $region13: #{dice_loss.1} parent=0 // pred_fallthru
    _
  %v85 = vld [vmem:[%s58] sm:$0xff]
  %v86 = vld [vmem:[%s58 + $0x8] sm:$0xff]
  %v87 = vld [vmem:[%s70] sm:$0xff]
  %v88 = vld [vmem:[%s70 + $0x8] sm:$0xff]
  %v89 = vxor.u32 %v85, 2147483648
  %v90 = vxor.u32 %v86, 2147483648
  %v91 = vmul.f32 %v89, 1.442695
  %v92 = vpow.pop %v91
  %v93 = vmul.f32 %v90, 1.442695
  %v94 = vpow.pop %v93
  %v95 = vadd.f32 %v92, 1.0
  %v96 = vadd.f32 %v94, 1.0
  %v97 = vrcp.pop %v95
  %v98 = vmul.f32 %v95, %v97
  %v99 = vsub.f32 1.0, %v98
  %v100 = vmul.f32 %v97, %v99
  %v101 = vadd.f32 %v97, %v100
  %vm102 = vweird.f32 %v95
  %vm103 = vweird.f32 %v97
  %vm104 = vmor %vm102, %vm103
  %v105 = vsel %vm104, %v97, %v101
  %v106 = vand.u32 2147483647, %v95
  %vm107 = vcmp.eq.f32.partialorder %v106, 8.507059e+37
  %v108 = vand.u32 %v95, 2147483648
  %v109 = vor.u32 1.1754944e-38, %v108
  %v110 = vsel %vm107, %v109, %v105
  %v111 = vmul.f32 1.0, %v110
  %v112 = vrcp.pop %v96
  %v113 = vmul.f32 %v96, %v112
  %v114 = vsub.f32 1.0, %v113
  %v115 = vmul.f32 %v112, %v114
  %v116 = vadd.f32 %v112, %v115
  %vm117 = vweird.f32 %v96
  %vm118 = vweird.f32 %v112
  %vm119 = vmor %vm117, %vm118
  %v120 = vsel %vm119, %v112, %v116
  %v121 = vand.u32 2147483647, %v96
  %vm122 = vcmp.eq.f32.partialorder %v121, 8.507059e+37
  %v123 = vand.u32 %v96, 2147483648
  %v124 = vor.u32 1.1754944e-38, %v123
  %v125 = vsel %vm122, %v124, %v120
  %v126 = vmul.f32 1.0, %v125
  %s127 = sadd.s32 0, 0
  %v128 = vlaneseq
  %v129 = vand.u32 %v128, 127
  %v130 = vadd.s32 %v129, 128
  %s131 = smul.u32 %s127, 256
  %v132 = vstv %s131
  %v133 = vadd.s32 %v132, %v129
  %v134 = vadd.s32 %v132, %v130
  %vm135 = vcmp.lt.s32.totalorder %v133, 256
  %vm136 = vcmp.lt.s32.totalorder %v134, 256
  %v137 = vmul.f32 %v111, %v87
  %v138 = vmul.f32 %v126, %v88
  %v139 = vsel %vm135, 1, 0
  %v140 = vsel %vm136, 1, 0
  %vm141 = vcmp.eq.s32.totalorder %v139, 1
  %vm142 = vcmp.eq.s32.totalorder %v140, 1
  %v143 = vsel %vm141, %v137, 0.0
  %v144 = vsel %vm142, %v138, 0.0
  %v145 = vmul.f32 %v111, %v111
  %v146 = vmul.f32 %v126, %v126
  %v147 = vsel %vm141, %v145, 0.0
  %v148 = vsel %vm142, %v146, 0.0
  %v149 = vmul.f32 %v87, %v87
  %v150 = vmul.f32 %v88, %v88
  %v151 = vsel %vm141, %v149, 0.0
  %v152 = vsel %vm142, %v150, 0.0
  %v153 = vld [vmem:[#allocation2] sm:$0xff]
  %v154 = vld [vmem:[#allocation2 + $0x8] sm:$0xff]
  %v155 = vadd.f32 %v143, 0.0
  %v156 = vadd.f32 %v144, 0.0
  %v157 = vadd.f32 %v153, %v155
  %v158 = vadd.f32 %v154, %v156
  %159 = vst [vmem:[#allocation2] sm:$0xff] %v157
  %160 = vst [vmem:[#allocation2 + $0x8] sm:$0xff] %v158
  %v161 = vld [vmem:[#allocation3] sm:$0xff]
  %v162 = vld [vmem:[#allocation3 + $0x8] sm:$0xff]
  %v163 = vadd.f32 %v147, 0.0
  %v164 = vadd.f32 %v148, 0.0
  %v165 = vadd.f32 %v161, %v163
  %v166 = vadd.f32 %v162, %v164
  %167 = vst [vmem:[#allocation3] sm:$0xff] %v165
  %168 = vst [vmem:[#allocation3 + $0x8] sm:$0xff] %v166
  %v169 = vld [vmem:[#allocation4] sm:$0xff]
  %v170 = vld [vmem:[#allocation4 + $0x8] sm:$0xff]
  %v171 = vadd.f32 %v151, 0.0
  %v172 = vadd.f32 %v152, 0.0
  %v173 = vadd.f32 %v169, %v171
  %v174 = vadd.f32 %v170, %v172
  %175 = vst [vmem:[#allocation4] sm:$0xff] %v173
  %176 = vst [vmem:[#allocation4 + $0x8] sm:$0xff] %v174
  // Predicated region
  $region14: #{dice_loss.1} parent=0 // pred_check
    %p177 = pneg %p75
  $region15: #{dice_loss.1} parent=0 // pred_check_branch
    %179 = sbr.rel (%p177) target = $region17
  $region16: #{dice_loss.1} parent=0 // pred_region
    %v180 = vld [vmem:[#allocation2] sm:$0xff]
    %v181 = vld [vmem:[#allocation2 + $0x8] sm:$0xff]
    %v182 = vadd.f32 %v180, %v181
    %183 = vadd.xlane.f32.xlu0 %v182
    %v184 = vpop.xlane.xlu0 %183
    %vm185 = vcmask 7168
    %186 = vst.msk [vmem:[%s2] sm:$0xff] %vm185, %v184
    %v187 = vld [vmem:[#allocation3] sm:$0xff]
    %v188 = vld [vmem:[#allocation3 + $0x8] sm:$0xff]
    %v189 = vadd.f32 %v187, %v188
    %190 = vadd.xlane.f32.xlu0 %v189
    %v191 = vpop.xlane.xlu0 %190
    %vm192 = vcmask 15368
    %193 = vst.msk [vmem:[%s2] sm:$0xff] %vm192, %v191
    %v194 = vld [vmem:[#allocation4] sm:$0xff]
    %v195 = vld [vmem:[#allocation4 + $0x8] sm:$0xff]
    %v196 = vadd.f32 %v194, %v195
    %197 = vadd.xlane.f32.xlu0 %v196
    %v198 = vpop.xlane.xlu0 %197
    %vm199 = vcmask 23568
    %200 = vst.msk [vmem:[%s2] sm:$0xff] %vm199, %v198
  $region17: #{dice_loss.1} parent=0 // pred_fallthru
    _
  // Predicated region
  $region18: #{dice_loss.1} parent=0 // pred_check
    _
  $region19: #{dice_loss.1} parent=0 // pred_check_branch
    %202 = sbr.rel (0) target = $region21
  $region20: #{dice_loss.1} parent=0 // pred_region
    _
  $region21: #{dice_loss.1} parent=0 // pred_fallthru
    _
  // Predicated region
  $region22: #{dice_loss.1} parent=0 // pred_check
    _
  $region23: #{dice_loss.1} parent=0 // pred_check_branch
    %204 = sbr.rel (0) target = $region25
  $region24: #{dice_loss.1} parent=0 // pred_region
    _
  $region25: #{dice_loss.1} parent=0 // pred_fallthru
    _

</llo_original>
